<compile_context>
chip_gen: v7x
topology: tpu7x:2x2x1
jax: 0.10.0
libtpu: 0.0.40
codegen_flags: <defaults>
</compile_context>

<pallas_src>
import functools
import math

import jax
import jax.numpy as jnp
from jax.experimental import pallas as pl
from jax.experimental.pallas import tpu as pltpu


def make_pe_table(max_length: int, d_model: int, dtype=jnp.float32):
    """Deterministic sinusoidal table, identical to the torch buffer `pe`."""
    position = jnp.arange(max_length, dtype=jnp.float32)[:, None]           # (L, 1)
    div_term = jnp.exp(
        jnp.arange(0, d_model, 2, dtype=jnp.float32)
        * (-math.log(10000.0) / d_model)
    )                                                                        # (D/2,)
    pe = jnp.zeros((max_length, d_model), jnp.float32)
    pe = pe.at[:, 0::2].set(jnp.sin(position * div_term))
    pe = pe.at[:, 1::2].set(jnp.cos(position * div_term))
    return pe.astype(dtype)


# ----------------------------- kernels --------------------------------------


def _pe_add_kernel(x_ref, pe_ref, o_ref):
    # x_ref: (B, TN), pe_ref: (1, TN) broadcast over the batch rows.
    o_ref[...] = x_ref[...] + pe_ref[...]


def _pe_add_dropout_kernel(x_ref, pe_ref, bits_ref, o_ref, *,
                           drop_threshold_24: int, inv_keep: float):
    # Inverted dropout: zero with prob p, scale survivors by 1/(1-p).
    y = x_ref[...] + pe_ref[...]
    # Top 24 random bits as a non-negative int32 -> portable signed compare.
    u24 = (bits_ref[...] >> jnp.uint32(8)).astype(jnp.int32)
    keep = u24 >= jnp.int32(drop_threshold_24)
    o_ref[...] = jnp.where(keep, y * inv_keep, jnp.zeros_like(y))


# ----------------------------- wrapper ---------------------------------------


def _choose_lane_tile(n_lanes: int, batch: int, itemsize: int, with_bits: bool,
                      budget_bytes: int = 16 * 1024 * 1024) -> int:
    """Largest lane tile (multiple of 128 dividing n_lanes) under a VMEM budget.

    Budget counts double-buffered x in/out (+ optional uint32 bits) tiles plus
    the double-buffered PE tile.
    """
    per_lane = 2 * batch * (2 * itemsize + (4 if with_bits else 0)) + 2 * itemsize
    cap = max(128, budget_bytes // max(per_lane, 1))
    if n_lanes <= cap:
        return n_lanes
    best = None
    t = 128
    while t <= cap:
        if n_lanes % t == 0:
            best = t
        t += 128
    # TODO(synk): if S*D has no 128-multiple divisor under the cap, fall back
    # to the full extent (may exceed the VMEM budget for pathological shapes).
    return best if best is not None else n_lanes


def positional_encoding(x, pe_table, *, p: float = 0.1,
                        deterministic: bool = True, rng_key=None):
    """x: (B, S, D) embeddings.  Returns dropout(x + pe[:S])."""
    B, S, D = x.shape
    N = S * D
    dt = x.dtype
    itemsize = jnp.dtype(dt).itemsize

    # Lane-dense views (free reshapes of contiguous arrays).
    x_flat = x.reshape(B, N)
    pe_flat = pe_table[:S, :].astype(dt).reshape(1, N)

    apply_dropout = (not deterministic) and p > 0.0
    TN = _choose_lane_tile(N, B, itemsize, with_bits=apply_dropout)
    n_tiles = N // TN

    x_spec = pl.BlockSpec((B, TN), lambda n: (0, n))
    pe_spec = pl.BlockSpec((1, TN), lambda n: (0, n))
    out_spec = pl.BlockSpec((B, TN), lambda n: (0, n))

    compiler_params = pltpu.CompilerParams(
        dimension_semantics=("parallel",),          # blocks are independent
        vmem_limit_bytes=32 * 1024 * 1024,
    )

    if not apply_dropout:
        out_flat = pl.pallas_call(
            _pe_add_kernel,
            out_shape=jax.ShapeDtypeStruct((B, N), dt),
            grid=(n_tiles,),
            in_specs=[x_spec, pe_spec],
            out_specs=out_spec,
            compiler_params=compiler_params,
        )(x_flat, pe_flat)
    else:
        if rng_key is None:
            rng_key = jax.random.PRNGKey(0)
        bits = jax.random.bits(rng_key, (B, N), dtype=jnp.uint32)
        bits_spec = pl.BlockSpec((B, TN), lambda n: (0, n))
        drop_threshold_24 = min(int(round(float(p) * (1 << 24))), (1 << 24) - 1)
        kernel = functools.partial(
            _pe_add_dropout_kernel,
            drop_threshold_24=drop_threshold_24,
            inv_keep=1.0 / (1.0 - float(p)),
        )
        out_flat = pl.pallas_call(
            kernel,
            out_shape=jax.ShapeDtypeStruct((B, N), dt),
            grid=(n_tiles,),
            in_specs=[x_spec, pe_spec, bits_spec],
            out_specs=out_spec,
            compiler_params=compiler_params,
        )(x_flat, pe_flat, bits)

    return out_flat.reshape(B, S, D)


def positional_encoding_ref(x, pe_table):
    """Pure-JAX reference for the deterministic (eval-mode) path."""
    S = x.shape[1]
    return x + pe_table[None, :S, :].astype(x.dtype)


# ----------------------------- demo / checks ---------------------------------

if __name__ == "__main__":
    B, S, D = 2, 8, 32
    MAX_LEN = 64
    P_DROP = 0.1

    key = jax.random.PRNGKey(0)
    kx, kdrop = jax.random.split(key)
    x = jax.random.normal(kx, (B, S, D), dtype=jnp.float32)
    pe_table = make_pe_table(MAX_LEN, D, dtype=jnp.float32)

    # Eval-mode (deterministic) path: exactly x + pe[:S]
    y_eval = positional_encoding(x, pe_table, p=P_DROP, deterministic=True)
    y_eval = jax.block_until_ready(y_eval)
    y_ref = positional_encoding_ref(x, pe_table)
    assert jnp.allclose(y_eval, y_ref, atol=1e-6, rtol=1e-6), "eval-mode mismatch"

    # Training-mode path: inverted dropout applied inside the kernel.
    y_train = positional_encoding(x, pe_table, p=P_DROP,
                                  deterministic=False, rng_key=kdrop)
    y_train = jax.block_until_ready(y_train)
    assert y_train.shape == (B, S, D)
    # survivors are exactly (x + pe)/(1-p), dropped entries are exactly 0
    scaled = y_ref / (1.0 - P_DROP)
    ok = jnp.logical_or(jnp.isclose(y_train, 0.0, atol=1e-6),
                        jnp.isclose(y_train, scaled, atol=1e-5, rtol=1e-5))
    assert bool(jnp.all(ok)), "training-mode dropout values inconsistent"

    print("KERNEL_OK")
</pallas_src>

<mosaic_0001>
module attributes {stable_mosaic.version = 11 : i64} {
  func.func @_pe_add_kernel(%arg0: i32, %arg1: memref<2x256xf32, #tpu.memory_space<vmem>>, %arg2: memref<1x256xf32, #tpu.memory_space<vmem>>, %arg3: memref<2x256xf32, #tpu.memory_space<vmem>>) attributes {dimension_semantics = [#tpu.dimension_semantics<parallel>], iteration_bounds = array<i64: 1>, scalar_prefetch = 0 : i64, scratch_operands = 0 : i64, tpu.core_type = #tpu.core_type<tc>, window_params = [{transform_indices = @transform_0, window_bounds = array<i64: 2, 256>}, {transform_indices = @transform_1, window_bounds = array<i64: 1, 256>}, {transform_indices = @transform_2, window_bounds = array<i64: 2, 256>}]} {
    %c0 = arith.constant 0 : index
    %c0_0 = arith.constant 0 : index
    %0 = vector.load %arg1[%c0, %c0_0] : memref<2x256xf32, #tpu.memory_space<vmem>>, vector<2x256xf32>
    %c0_1 = arith.constant 0 : index
    %c0_2 = arith.constant 0 : index
    %1 = vector.load %arg2[%c0_1, %c0_2] : memref<1x256xf32, #tpu.memory_space<vmem>>, vector<1x256xf32>
    %2 = vector.broadcast %1 : vector<1x256xf32> to vector<2x256xf32>
    %3 = arith.addf %0, %2 : vector<2x256xf32>
    %c0_3 = arith.constant 0 : index
    %c0_4 = arith.constant 0 : index
    %4 = vector.load %arg3[%c0_3, %c0_4] : memref<2x256xf32, #tpu.memory_space<vmem>>, vector<2x256xf32>
    tpu.vector_store %arg3[%c0_3, %c0_4], %3 {strides = array<i32>} : memref<2x256xf32, #tpu.memory_space<vmem>>, vector<2x256xf32>,
    return
  }
  func.func @transform_0(%arg0: i32) -> (i32, i32) {
    %c0_i32 = arith.constant 0 : i32
    %c0_i32_0 = arith.constant 0 : i32
    return %c0_i32, %arg0 : i32, i32
  }
  func.func @transform_1(%arg0: i32) -> (i32, i32) {
    %c0_i32 = arith.constant 0 : i32
    %c0_i32_0 = arith.constant 0 : i32
    return %c0_i32, %arg0 : i32, i32
  }
  func.func @transform_2(%arg0: i32) -> (i32, i32) {
    %c0_i32 = arith.constant 0 : i32
    %c0_i32_0 = arith.constant 0 : i32
    return %c0_i32, %arg0 : i32, i32
  }
}

</mosaic_0001>

<llo_original>
// kernel: tpu_custom_call.1
$region0: #{tpu_custom_call.1}
  #allocation0 [shape = 'u32[]', space=smem, size = 0x4, offset = 0x4, fixed_abs, tag = 'smem constant byte address 0x4 - core index']
  #allocation1 [shape = 'u32[144,128]{1,0:T(1,128)}', space=vmem, size = 0x12000, scoped, tag = 'internal scratch']
  %s0 = inlined_call_operand.hbm [shape: f32[2,256], index: 0, kind: input, shape index: {}]
  %s1 = inlined_call_operand.vmem [shape: f32[1,256], index: 1, kind: input, shape index: {}]
  %s2 = inlined_call_operand.hbm [shape: f32[2,256], index: 2, kind: output, shape index: {}]
  %s3 = sld [smem:[#allocation0]]
  $region22: #{tpu_custom_call.1} parent=0
    _
  %s5 = ssub.s32 1, %s3
  %s6 = scalar_select 0, %s5, %s3
  $region1: #{tpu_custom_call.1} parent=0
    #allocation2 [shape = 'u8[2048]{0}', space=vmem, size = 0x800, scoped, tag = 'input window, operand 0, single buffered']
    #allocation3 [shape = 's32[1]{0}', space=sflag, size = 0x4, scoped, tag = 'scoped memory for tpu_custom_call.1']
    #allocation4 [shape = 's32[1]{0}', space=sflag, size = 0x4, scoped, tag = 'scoped memory for tpu_custom_call.1']
    #allocation5 [shape = 'u8[2048]{0}', space=vmem, size = 0x800, scoped, tag = 'output window, operand 0, single buffered']
    %7 = vsyncpa [#allocation3], 0
    %8 = vsyncpa [#allocation4], 0
    // Predicated region
    $region2: #{tpu_custom_call.1} parent=1 // pred_check
      _
    $region3: #{tpu_custom_call.1} parent=1 // pred_check_branch
      %10 = sbr.rel (0) target = $region5
    $region4: #{tpu_custom_call.1} parent=1 // pred_region
      %s12 = ssub.s32 64, 64
      %13 = vsyncadd [#allocation3], %s12
      %s15 = sshll.u32 [#allocation2], 4
      %s16 = int_to_ptr.vmem [resolvable:$true] %s15
      %18 = dma.hbm_to_vmem [thread:$0]  %s0, 64, %s16, [#allocation3]
    $region5: #{tpu_custom_call.1} parent=1 // pred_fallthru
      _
    // Predicated region
    $region6: #{tpu_custom_call.1} parent=1 // pred_check
      _
    $region7: #{tpu_custom_call.1} parent=1 // pred_check_branch
      %20 = sbr.rel (0) target = $region9
    $region8: #{tpu_custom_call.1} parent=1 // pred_region
      _
    $region9: #{tpu_custom_call.1} parent=1 // pred_fallthru
      _
    // Predicated region
    $region10: #{tpu_custom_call.1} parent=1 // pred_check
      _
    $region11: #{tpu_custom_call.1} parent=1 // pred_check_branch
      %22 = sbr.rel (0) target = $region13
    $region12: #{tpu_custom_call.1} parent=1 // pred_region
      %23 = dma.done [#allocation3], 64
    $region13: #{tpu_custom_call.1} parent=1 // pred_fallthru
      _
    %v24 = vld [vmem:[#allocation2] sm:$0xf]
    %v25 = vld [vmem:[%s1] sm:$0x3]
    %v27 = vlaneseq
    %v28 = vshrl.u32 %v27, 7
    %v29 = vsub.s32 0, %v28
    %v30 = vrot.slane %v25, %v29
    %v31 = vlaneseq
    %v32 = vshrl.u32 %v31, 7
    %v33 = vsub.s32 1, %v32
    %v34 = vrot.slane %v25, %v33
    %v35 = vcombine.low %v30, %v34
    %v37 = vunpack.c.l.s4 1983009808
    %v38 = vunpack.c.0.s8 %v37
    %v39 = vlaneseq
    %v40 = vshrl.u32 %v39, 7
    %v41 = vsub.s32 %v38, %v40
    %v42 = vrot.slane %v35, %v41
    %v44 = vadd.f32 %v24, %v42
    %45 = vst [vmem:[#allocation5] sm:$0xf] %v44
    // Predicated region
    $region14: #{tpu_custom_call.1} parent=1 // pred_check
      _
    $region15: #{tpu_custom_call.1} parent=1 // pred_check_branch
      %47 = sbr.rel (0) target = $region17
    $region16: #{tpu_custom_call.1} parent=1 // pred_region
      %s49 = ssub.s32 64, 64
      %50 = vsyncadd [#allocation4], %s49
      %s52 = sshll.u32 [#allocation5], 4
      %s53 = int_to_ptr.vmem [resolvable:$true] %s52
      %55 = dma.vmem_to_hbm [thread:$0]  %s53, 64, %s2, [#allocation4]
    $region17: #{tpu_custom_call.1} parent=1 // pred_fallthru
      _
    // Predicated region
    $region18: #{tpu_custom_call.1} parent=1 // pred_check
      _
    $region19: #{tpu_custom_call.1} parent=1 // pred_check_branch
      %57 = sbr.rel (0) target = $region21
    $region20: #{tpu_custom_call.1} parent=1 // pred_region
      %58 = dma.done [#allocation4], 64
    $region21: #{tpu_custom_call.1} parent=1 // pred_fallthru
      _
    %59 = vsyncpa [#allocation3], 1
    %60 = vsyncpa [#allocation4], 1

</llo_original>
